<compile_context>
chip_gen: v6e
topology: v6e:2x2x1
jax: 0.10.0
libtpu: 0.0.40
codegen_flags: <defaults>
</compile_context>

<pallas_src>
import jax
import jax.numpy as jnp
from jax.experimental import pallas as pl
from jax.experimental.pallas import tpu as pltpu


def _round_up(v, m):
    return ((v + m - 1) // m) * m


def _frozen_bn_kernel(scale_ref, shift_ref, x_ref, o_ref):
    # scale/shift: (c_tile, 1) float32; x/o: (n_tile, c_tile, hw_tile).
    # Single VPU multiply-add in f32 (lane/batch broadcast of the per-channel
    # column), cast to the output dtype once at the store.
    scale = scale_ref[...][None, :, :]
    shift = shift_ref[...][None, :, :]
    o_ref[...] = (x_ref[...].astype(jnp.float32) * scale + shift).astype(o_ref.dtype)


def _vmem_budget():
    """(target_block_bytes, vmem_cap_bytes) tuned per TPU generation."""
    try:
        vmem_cap = int(pltpu.get_tpu_info().vmem_capacity_bytes)
    except Exception:
        vmem_cap = 64 * 1024 * 1024  # assume the smallest (v7x-sized) VMEM
    if vmem_cap >= 128 * 1024 * 1024:               # v5e / v6e (128 MiB VMEM)
        return 4 * 1024 * 1024, 64 * 1024 * 1024
    return 2 * 1024 * 1024, 48 * 1024 * 1024        # v7x (64 MiB VMEM per TC)


def _pick_block(N, C, HW, itemsize, sub, target_bytes,
                min_steps=8, small_block_bytes=512 * 1024):
    """Choose (n_tile, c_tile, hw_tile).

    Rules:
      * hw_tile (lane axis) is the full HW or a multiple of 128.
      * c_tile (sublane axis) is the full C or a multiple of the dtype's
        sublane packing `sub` (8 f32 / 16 bf16 / 32 int8).
      * the layout-padded block (c -> sub, hw -> 128) stays <= ~target_bytes.
      * at least 2 (ideally >= min_steps) grid steps whenever the data allows,
        so both v7x TensorCores are fed and the DMA pipeline can overlap.
    """
    target_elems = max(sub * 128, target_bytes // itemsize)

    # Lane axis: full HW when at least one sublane packet of rows fits the
    # budget (or HW is tiny); otherwise a 128-multiple slice of HW.
    if HW <= 128 or HW * sub <= target_elems:
        hw_tile = HW
    else:
        hw_tile = max(128, min(HW, ((target_elems // sub) // 128) * 128))
    hw_pad = _round_up(hw_tile, 128)

    # Sublane (channel) axis: as many channels as the padded budget allows,
    # capped so the lane-padded (c_tile, 1) scale/shift buffers stay small.
    rows_budget = max(1, target_elems // hw_pad)
    c_limit = min(rows_budget, 2048)
    if C <= max(c_limit, sub):
        c_tile = C
    else:
        c_tile = max(sub, (c_limit // sub) * sub)
    c_pad = _round_up(c_tile, sub)

    # Batch axis soaks up whatever padded budget remains.
    n_tile = max(1, min(N, rows_budget // c_pad))

    # Guarantee >= 2 (ideally >= min_steps) grid steps when possible.
    while True:
        steps = pl.cdiv(N, n_tile) * pl.cdiv(C, c_tile) * pl.cdiv(HW, hw_tile)
        block_bytes = n_tile * c_tile * hw_tile * itemsize
        if steps >= min_steps:
            break
        if steps >= 2 and block_bytes <= small_block_bytes:
            break
        if n_tile > 1:
            n_tile = max(1, n_tile // 2)
        elif hw_tile > 128 and hw_tile % 256 == 0:
            hw_tile //= 2
        elif hw_tile == HW and HW > 256:
            hw_tile = _round_up(HW // 2, 128)
        elif c_tile > sub and c_tile % (2 * sub) == 0:
            c_tile //= 2
        elif c_tile == C and C > 2 * sub:
            c_tile = max(sub, ((C // 2) // sub) * sub)
        else:
            break
    return n_tile, c_tile, hw_tile


def frozen_batchnorm2d(x, weight, bias, running_mean, running_var):
    """x: (N, C, H, W); per-channel buffers: (C,).  Returns (N, C, H, W)."""
    N, C, H, W = x.shape
    HW = H * W
    itemsize = jnp.dtype(x.dtype).itemsize
    sub = max(8, 32 // itemsize)     # sublane packing: 8 f32, 16 bf16/f16, 32 int8

    # Per-channel affine, computed once in f32 (O(C)) and kept in f32: the
    # in-kernel FMA runs in f32 and narrows only at the store.
    f32 = jnp.float32
    scale = weight.astype(f32) * jax.lax.rsqrt(running_var.astype(f32))
    shift = bias.astype(f32) - running_mean.astype(f32) * scale
    scale_col = scale.reshape(C, 1)
    shift_col = shift.reshape(C, 1)

    x3 = x.reshape(N, C, HW)         # lane-dense spatial axis (free reshape)

    target_bytes, vmem_cap = _vmem_budget()
    n_tile, c_tile, hw_tile = _pick_block(N, C, HW, itemsize, sub, target_bytes)
    grid = (pl.cdiv(N, n_tile), pl.cdiv(C, c_tile), pl.cdiv(HW, hw_tile))

    # Honest VMEM accounting (layout-padded): x + out blocks, each double
    # buffered, plus the (8,128)-padded f32 scale/shift blocks (also double
    # buffered) and ~2 MiB of compiler-scratch headroom.
    c_pad = _round_up(c_tile, sub)
    hw_pad = _round_up(hw_tile, 128)
    block_vmem = n_tile * c_pad * hw_pad * itemsize
    affine_vmem = 2 * 2 * _round_up(c_tile, 8) * 128 * 4
    need = 4 * block_vmem + affine_vmem + 2 * 1024 * 1024
    vmem_limit = int(min(vmem_cap, max(16 * 1024 * 1024, need)))

    out3 = pl.pallas_call(
        _frozen_bn_kernel,
        out_shape=jax.ShapeDtypeStruct((N, C, HW), x.dtype),
        grid=grid,
        in_specs=[
            pl.BlockSpec((c_tile, 1), lambda n, c, j: (c, 0)),              # scale (f32)
            pl.BlockSpec((c_tile, 1), lambda n, c, j: (c, 0)),              # shift (f32)
            pl.BlockSpec((n_tile, c_tile, hw_tile), lambda n, c, j: (n, c, j)),
        ],
        out_specs=pl.BlockSpec((n_tile, c_tile, hw_tile), lambda n, c, j: (n, c, j)),
        compiler_params=pltpu.CompilerParams(
            dimension_semantics=("parallel", "parallel", "parallel"),
            vmem_limit_bytes=vmem_limit),
    )(scale_col, shift_col, x3)

    return out3.reshape(N, C, H, W)


if __name__ == "__main__":
    key = jax.random.PRNGKey(0)
    kx, kw, kb, km, kv = jax.random.split(key, 5)

    N, C, H, W = 2, 4, 16, 16
    x = jax.random.normal(kx, (N, C, H, W), dtype=jnp.float32)

    # Deterministic "frozen" buffers (module __init__ shapes: all (C,)).
    weight = 1.0 + 0.1 * jax.random.normal(kw, (C,), dtype=jnp.float32)
    bias = 0.1 * jax.random.normal(kb, (C,), dtype=jnp.float32)
    running_mean = 0.5 * jax.random.normal(km, (C,), dtype=jnp.float32)
    running_var = jnp.abs(jax.random.normal(kv, (C,), dtype=jnp.float32)) + 0.5

    out = frozen_batchnorm2d(x, weight, bias, running_mean, running_var)
    out = jax.block_until_ready(out)

    # Pure-JAX reference of the PyTorch forward (no eps, matching the module).
    scale_ref = weight * jax.lax.rsqrt(running_var)
    shift_ref = bias - running_mean * scale_ref
    ref = x * scale_ref.reshape(1, -1, 1, 1) + shift_ref.reshape(1, -1, 1, 1)

    assert out.shape == (N, C, H, W)
    assert jnp.allclose(out, ref, atol=1e-5, rtol=1e-5)
    print("KERNEL_OK")
</pallas_src>

<mosaic_0001>
module attributes {stable_mosaic.version = 11 : i64} {
  func.func @_frozen_bn_kernel(%arg0: i32, %arg1: i32, %arg2: i32, %arg3: memref<4x1xf32, #tpu.memory_space<vmem>>, %arg4: memref<4x1xf32, #tpu.memory_space<vmem>>, %arg5: memref<1x4x256xf32, #tpu.memory_space<vmem>>, %arg6: memref<1x4x256xf32, #tpu.memory_space<vmem>>) attributes {dimension_semantics = [#tpu.dimension_semantics<parallel>, #tpu.dimension_semantics<parallel>, #tpu.dimension_semantics<parallel>], iteration_bounds = array<i64: 2, 1, 1>, scalar_prefetch = 0 : i64, scratch_operands = 0 : i64, tpu.core_type = #tpu.core_type<tc>, window_params = [{transform_indices = @transform_0, window_bounds = array<i64: 4, 1>}, {transform_indices = @transform_1, window_bounds = array<i64: 4, 1>}, {transform_indices = @transform_2, window_bounds = array<i64: 1, 4, 256>}, {transform_indices = @transform_3, window_bounds = array<i64: 1, 4, 256>}]} {
    %c0 = arith.constant 0 : index
    %c0_0 = arith.constant 0 : index
    %0 = vector.load %arg3[%c0, %c0_0] : memref<4x1xf32, #tpu.memory_space<vmem>>, vector<4x1xf32>
    %1 = vector.shape_cast %0 : vector<4x1xf32> to vector<1x4x1xf32>
    %c0_1 = arith.constant 0 : index
    %c0_2 = arith.constant 0 : index
    %2 = vector.load %arg4[%c0_1, %c0_2] : memref<4x1xf32, #tpu.memory_space<vmem>>, vector<4x1xf32>
    %3 = vector.shape_cast %2 : vector<4x1xf32> to vector<1x4x1xf32>
    %c0_3 = arith.constant 0 : index
    %c0_4 = arith.constant 0 : index
    %c0_5 = arith.constant 0 : index
    %4 = vector.load %arg5[%c0_3, %c0_4, %c0_5] : memref<1x4x256xf32, #tpu.memory_space<vmem>>, vector<1x4x256xf32>
    %5 = vector.broadcast %1 : vector<1x4x1xf32> to vector<1x4x256xf32>
    %6 = arith.mulf %4, %5 : vector<1x4x256xf32>
    %7 = vector.broadcast %3 : vector<1x4x1xf32> to vector<1x4x256xf32>
    %8 = arith.addf %6, %7 : vector<1x4x256xf32>
    %c0_6 = arith.constant 0 : index
    %c0_7 = arith.constant 0 : index
    %c0_8 = arith.constant 0 : index
    %9 = vector.load %arg6[%c0_6, %c0_7, %c0_8] : memref<1x4x256xf32, #tpu.memory_space<vmem>>, vector<1x4x256xf32>
    tpu.vector_store %arg6[%c0_6, %c0_7, %c0_8], %8 {strides = array<i32>} : memref<1x4x256xf32, #tpu.memory_space<vmem>>, vector<1x4x256xf32>,
    return
  }
  func.func @transform_0(%arg0: i32, %arg1: i32, %arg2: i32) -> (i32, i32) {
    %c0_i32 = arith.constant 0 : i32
    %c0_i32_0 = arith.constant 0 : i32
    return %arg1, %c0_i32 : i32, i32
  }
  func.func @transform_1(%arg0: i32, %arg1: i32, %arg2: i32) -> (i32, i32) {
    %c0_i32 = arith.constant 0 : i32
    %c0_i32_0 = arith.constant 0 : i32
    return %arg1, %c0_i32 : i32, i32
  }
  func.func @transform_2(%arg0: i32, %arg1: i32, %arg2: i32) -> (i32, i32, i32) {
    %c0_i32 = arith.constant 0 : i32
    return %arg0, %arg1, %arg2 : i32, i32, i32
  }
  func.func @transform_3(%arg0: i32, %arg1: i32, %arg2: i32) -> (i32, i32, i32) {
    %c0_i32 = arith.constant 0 : i32
    return %arg0, %arg1, %arg2 : i32, i32, i32
  }
}

</mosaic_0001>

<llo_original>
// kernel: tpu_custom_call.1
$region0: #{tpu_custom_call.1}
  #allocation0 [shape = 'u32[]', space=smem, size = 0x4, offset = 0x4, fixed_abs, tag = 'smem constant byte address 0x4 - core index']
  #allocation1 [shape = 'u32[144,128]{1,0:T(1,128)}', space=vmem, size = 0x12000, scoped, tag = 'internal scratch']
  %s0 = inlined_call_operand.vmem [shape: f32[4,1], index: 0, kind: input, shape index: {}]
  %s1 = inlined_call_operand.vmem [shape: f32[4,1], index: 1, kind: input, shape index: {}]
  %s2 = inlined_call_operand.hbm [shape: f32[2,4,256], index: 2, kind: input, shape index: {}]
  %s3 = inlined_call_operand.hbm [shape: f32[2,4,256], index: 3, kind: output, shape index: {}]
  %s4 = sld [smem:[#allocation0]]
  $region49: #{tpu_custom_call.1} parent=0
    _
  %s6 = ssub.s32 1, %s4
  %s7 = scalar_select 0, %s6, %s4
  $region1: #{tpu_custom_call.1} parent=0
    #allocation2 [shape = 'u8[8192]{0}', space=vmem, size = 0x2000, scoped, tag = 'input window, operand 2']
    #allocation3 [shape = 's32[2]{0}', space=sflag, size = 0x8, scoped, tag = 'scoped memory for tpu_custom_call.1']
    #allocation4 [shape = 's32[2]{0}', space=sflag, size = 0x8, scoped, tag = 'scoped memory for tpu_custom_call.1']
    #allocation5 [shape = 'u8[8192]{0}', space=vmem, size = 0x2000, scoped, tag = 'output window, operand 0']
    %8 = vsyncpa [#allocation3], 0
    %s9 = scalar_lea.sflag [#allocation3], 1
    %10 = vsyncpa %s9, 0
    %11 = vsyncpa [#allocation4], 0
    %s12 = scalar_lea.sflag [#allocation4], 1
    %13 = vsyncpa %s12, 0
    loop: start=0, step=1, limit=4
    $region2: #{tpu_custom_call.1} parent=1 // loop_pre_header
      _
    $region3: #{tpu_custom_call.1} parent=1 // loop_header
      %s15 = sphi 0, %s19
      %p16 = scmp.ge.s32.totalorder %s15, 4
      %s22 = sphi 0, %s41
      %s23 = sphi 0, %s37
      %s24 = sphi 0, %s33
      %s25 = sphi 0, %s22
      %s26 = sphi 0, %s23
      %s27 = sphi 0, %s24
      %s28 = sphi 0, %s25
      %s29 = sphi 0, %s26
      %s30 = sphi 0, %s27
      %s44 = sphi 0, %s46
      %s47 = sphi 0, %s44
      %s48 = sphi 0, %s47
      %s64 = sphi 0, %s48
      %s70 = sphi 0, %s72
      %s73 = sphi 0, %s70
      %s74 = sphi 0, %s73
      %s90 = sphi 0, %s74
      %s100 = sphi 0, %s102
      %s103 = sphi 0, %s100
      %s104 = sphi 0, %s103
      %s120 = sphi 0, %s104
      %s130 = sphi 0, %s132
      %s133 = sphi 0, %s130
      %s134 = sphi 0, %s133
      %s150 = sphi 0, %s134
    $region4: #{tpu_custom_call.1} parent=1 // loop_header_branch
      %18 = sbr.rel (%p16) target = $region8
    $region5: #{tpu_custom_call.1} parent=1 // loop_body
      %s20 = ssub.s32 %s15, 1
      %s21 = ssub.s32 %s15, 2
      %s31 = sadd.s32 1, %s24
      %p32 = scmp.ge.s32.totalorder %s31, 1
      %s33 = scalar_select %p32, 0, %s31
      %s34 = sadd.s32 1, %s23
      %s35 = scalar_select %p32, %s34, %s23
      %p36 = scmp.ge.s32.totalorder %s35, 1
      %s37 = scalar_select %p36, 0, %s35
      %s38 = sadd.s32 1, %s22
      %s39 = scalar_select %p36, %s38, %s22
      %p40 = scmp.ge.s32.totalorder %s39, 2
      %s41 = scalar_select %p40, 0, %s39
      %s42 = ssub.s32 %s23, %s37
      %p43 = scmp.eq.s32.totalorder %s42, 0
      %s45 = sadd.s32 %s44, 1
      %s46 = scalar_select %p43, %s44, %s45
      %p49 = pneg %p43
      %p50 = scmp.eq.s32.totalorder %s15, 1
      %p51 = por %p49, %p50
      %p52 = scmp.ne.s32.totalorder %s44, %s47
      %p53 = scmp.eq.s32.totalorder %s15, 0
      %p54 = por %p52, %p53
      %p55 = scmp.ne.s32.totalorder %s44, %s47
      %p56 = scmp.eq.s32.totalorder %s20, 1
      %p57 = por %p55, %p56
      %p58 = scmp.ne.s32.totalorder %s47, %s48
      %p59 = scmp.eq.s32.totalorder %s20, 0
      %p60 = por %p58, %p59
      %p61 = scmp.ne.s32.totalorder %s47, %s48
      %p62 = scmp.eq.s32.totalorder %s21, 1
      %p63 = por %p61, %p62
      %p65 = scmp.ne.s32.totalorder %s48, %s64
      %p66 = scmp.eq.s32.totalorder %s21, 0
      %p67 = por %p65, %p66
      %s68 = ssub.s32 %s23, %s37
      %p69 = scmp.eq.s32.totalorder %s68, 0
      %s71 = sadd.s32 %s70, 1
      %s72 = scalar_select %p69, %s70, %s71
      %p75 = pneg %p69
      %p76 = scmp.eq.s32.totalorder %s15, 1
      %p77 = por %p75, %p76
      %p78 = scmp.ne.s32.totalorder %s70, %s73
      %p79 = scmp.eq.s32.totalorder %s15, 0
      %p80 = por %p78, %p79
      %p81 = scmp.ne.s32.totalorder %s70, %s73
      %p82 = scmp.eq.s32.totalorder %s20, 1
      %p83 = por %p81, %p82
      %p84 = scmp.ne.s32.totalorder %s73, %s74
      %p85 = scmp.eq.s32.totalorder %s20, 0
      %p86 = por %p84, %p85
      %p87 = scmp.ne.s32.totalorder %s73, %s74
      %p88 = scmp.eq.s32.totalorder %s21, 1
      %p89 = por %p87, %p88
      %p91 = scmp.ne.s32.totalorder %s74, %s90
      %p92 = scmp.eq.s32.totalorder %s21, 0
      %p93 = por %p91, %p92
      %s94 = ssub.s32 %s22, %s41
      %s95 = ssub.s32 %s23, %s37
      %s96 = sor.u32 %s94, %s95
      %s97 = ssub.s32 %s24, %s33
      %s98 = sor.u32 %s96, %s97
      %p99 = scmp.eq.s32.totalorder %s98, 0
      %s101 = sadd.s32 %s100, 1
      %s102 = scalar_select %p99, %s100, %s101
      %p105 = pneg %p99
      %p106 = scmp.eq.s32.totalorder %s15, 1
      %p107 = por %p105, %p106
      %p108 = scmp.ne.s32.totalorder %s100, %s103
      %p109 = scmp.eq.s32.totalorder %s15, 0
      %p110 = por %p108, %p109
      %p111 = scmp.ne.s32.totalorder %s100, %s103
      %p112 = scmp.eq.s32.totalorder %s20, 1
      %p113 = por %p111, %p112
      %p114 = scmp.ne.s32.totalorder %s103, %s104
      %p115 = scmp.eq.s32.totalorder %s20, 0
      %p116 = por %p114, %p115
      %p117 = scmp.ne.s32.totalorder %s103, %s104
      %p118 = scmp.eq.s32.totalorder %s21, 1
      %p119 = por %p117, %p118
      %p121 = scmp.ne.s32.totalorder %s104, %s120
      %p122 = scmp.eq.s32.totalorder %s21, 0
      %p123 = por %p121, %p122
      %s124 = ssub.s32 %s22, %s41
      %s125 = ssub.s32 %s23, %s37
      %s126 = sor.u32 %s124, %s125
      %s127 = ssub.s32 %s24, %s33
      %s128 = sor.u32 %s126, %s127
      %p129 = scmp.eq.s32.totalorder %s128, 0
      %s131 = sadd.s32 %s130, 1
      %s132 = scalar_select %p129, %s130, %s131
      %p135 = pneg %p129
      %p136 = scmp.eq.s32.totalorder %s15, 1
      %p137 = por %p135, %p136
      %p138 = scmp.ne.s32.totalorder %s130, %s133
      %p139 = scmp.eq.s32.totalorder %s15, 0
      %p140 = por %p138, %p139
      %p141 = scmp.ne.s32.totalorder %s130, %s133
      %p142 = scmp.eq.s32.totalorder %s20, 1
      %p143 = por %p141, %p142
      %p144 = scmp.ne.s32.totalorder %s133, %s134
      %p145 = scmp.eq.s32.totalorder %s20, 0
      %p146 = por %p144, %p145
      %p147 = scmp.ne.s32.totalorder %s133, %s134
      %p148 = scmp.eq.s32.totalorder %s21, 1
      %p149 = por %p147, %p148
      %p151 = scmp.ne.s32.totalorder %s134, %s150
      %p152 = scmp.eq.s32.totalorder %s21, 0
      %p153 = por %p151, %p152
      %p154 = scmp.le.s32.totalorder 1, %s15
      %p155 = scmp.lt.s32.totalorder %s15, 3
      %p156 = pnand %p154, %p155
      %p157 = pneg %p156
      // Predicated region
      $region9: #{tpu_custom_call.1} parent=5 // pred_check
        _
      $region10: #{tpu_custom_call.1} parent=5 // pred_check_branch
        %159 = sbr.rel (%p156) target = $region12
      $region11: #{tpu_custom_call.1} parent=5 // pred_region
        %s160 = ssub.s32 %s15, 1
        // Predicated region
        $region13: #{tpu_custom_call.1} parent=11 // pred_check
          %p161 = pneg %p60
        $region14: #{tpu_custom_call.1} parent=11 // pred_check_branch
          %163 = sbr.rel (%p161) target = $region16
        $region15: #{tpu_custom_call.1} parent=11 // pred_region
          %p164 = scmp.lt.s32.totalorder %s26, 0
          %s165 = scalar_select %p164, %s26, 0
          %s166 = smul.addr %s165, 4
          %s167 = scalar_lea.vmem %s0, %s166
        $region16: #{tpu_custom_call.1} parent=11 // pred_fallthru
          _
        // Predicated region
        $region17: #{tpu_custom_call.1} parent=11 // pred_check
          %p168 = pneg %p86
        $region18: #{tpu_custom_call.1} parent=11 // pred_check_branch
          %170 = sbr.rel (%p168) target = $region20
        $region19: #{tpu_custom_call.1} parent=11 // pred_region
          %p171 = scmp.lt.s32.totalorder %s26, 0
          %s172 = scalar_select %p171, %s26, 0
          %s173 = smul.addr %s172, 4
          %s174 = scalar_lea.vmem %s1, %s173
        $region20: #{tpu_custom_call.1} parent=11 // pred_fallthru
          _
      $region12: #{tpu_custom_call.1} parent=5 // pred_fallthru
        _
      %p175 = scmp.lt.s32.totalorder %s15, 2
      // Predicated region
      $region21: #{tpu_custom_call.1} parent=5 // pred_check
        %p176 = pneg %p175
      $region22: #{tpu_custom_call.1} parent=5 // pred_check_branch
        %178 = sbr.rel (%p176) target = $region24
      $region23: #{tpu_custom_call.1} parent=5 // pred_region
        // Predicated region
        $region25: #{tpu_custom_call.1} parent=23 // pred_check
          %p179 = pneg %p110
        $region26: #{tpu_custom_call.1} parent=23 // pred_check_branch
          %181 = sbr.rel (%p179) target = $region28
        $region27: #{tpu_custom_call.1} parent=23 // pred_region
          %s182 = sand.u32 %s100, 1
          %s183 = scalar_lea.sflag [#allocation3], %s182
          %s184 = sand.u32 %s100, 1
          %s185 = smul.addr %s184, 8
          %s186 = scalar_lea.vmem [#allocation2], %s185
          %s187 = smul.u32 2, %s24
          %s189 = ssub.s32 128, 128
          %190 = vsyncadd %s183, %s189
          %s191 = smul.addr %s23, 2
          %s192 = sadd.s32 %s187, %s191
          %s193 = smul.addr %s22, 2
          %s194 = sadd.s32 %s192, %s193
          %s195 = smul.addr %s194, 64
          %s196 = scalar_lea.hbm %s2, %s195
          %s198 = sshll.u32 %s186, 4
          %s199 = int_to_ptr.vmem [resolvable:$true] %s198
          %201 = dma.hbm_to_vmem [thread:$0]  %s196, 128, %s199, %s183
        $region28: #{tpu_custom_call.1} parent=23 // pred_fallthru
          _
      $region24: #{tpu_custom_call.1} parent=5 // pred_fallthru
        _
      %p202 = scmp.le.s32.totalorder 1, %s15
      %p203 = scmp.lt.s32.totalorder %s15, 3
      %p204 = pnand %p202, %p203
      %p205 = pneg %p204
      // Predicated region
      $region29: #{tpu_custom_call.1} parent=5 // pred_check
        _
      $region30: #{tpu_custom_call.1} parent=5 // pred_check_branch
        %207 = sbr.rel (%p204) target = $region32
      $region31: #{tpu_custom_call.1} parent=5 // pred_region
        %s208 = ssub.s32 %s15, 1
        %s209 = sand.u32 %s103, 1
        %s210 = scalar_lea.sflag [#allocation3], %s209
        %s211 = sand.u32 %s103, 1
        %s212 = smul.addr %s211, 8
        %s213 = scalar_lea.vmem [#allocation2], %s212
        // Predicated region
        $region33: #{tpu_custom_call.1} parent=31 // pred_check
          %p214 = pneg %p116
        $region34: #{tpu_custom_call.1} parent=31 // pred_check_branch
          %216 = sbr.rel (%p214) target = $region36
        $region35: #{tpu_custom_call.1} parent=31 // pred_region
          %217 = dma.done %s210, 128
        $region36: #{tpu_custom_call.1} parent=31 // pred_fallthru
          _
        %p218 = scmp.lt.s32.totalorder %s26, 0
        %s219 = scalar_select %p218, %s26, 0
        %s220 = smul.addr %s219, 4
        %s221 = scalar_lea.vmem %s0, %s220
        %p222 = pneg %p60
        %p223 = pneg %p57
        %p224 = scmp.lt.s32.totalorder %s26, 0
        %s225 = scalar_select %p224, %s26, 0
        %s226 = smul.addr %s225, 4
        %s227 = scalar_lea.vmem %s1, %s226
        %p228 = pneg %p86
        %p229 = pneg %p83
        %s230 = sand.u32 %s103, 1
        %s231 = scalar_lea.sflag [#allocation3], %s230
        %s232 = sand.u32 %s103, 1
        %s233 = smul.addr %s232, 8
        %s234 = scalar_lea.vmem [#allocation2], %s233
        %p235 = pneg %p116
        %p236 = pneg %p113
        %p237 = pneg %p146
        %p238 = pneg %p143
        %s239 = sand.u32 %s133, 1
        %s240 = scalar_lea.sflag [#allocation4], %s239
        %s241 = sand.u32 %s133, 1
        %s242 = smul.addr %s241, 8
        %s243 = scalar_lea.vmem [#allocation5], %s242
        %p244 = scmp.lt.s32.totalorder %s26, 0
        %s245 = scalar_select %p244, %s26, 0
        %s246 = smul.addr %s245, 4
        %s247 = scalar_lea.vmem %s0, %s246
        %p248 = scmp.lt.s32.totalorder %s26, 0
        %s249 = scalar_select %p248, %s26, 0
        %s250 = smul.addr %s249, 4
        %s251 = scalar_lea.vmem %s1, %s250
        %s252 = smul.u32 2, %s27
        %s253 = smul.u32 2, %s27
        %v254 = vld [vmem:[%s247] sm:$0xf]
        %v255 = vld [vmem:[%s251] sm:$0xf]
        %v256 = vld [vmem:[%s213] sm:$0xff]
        %258 = vset.pattern.permute.xlu0 0
        %259 = vperm.xlu0 %258, %v254
        %v260 = vpop.permute.xlu0 %259
        %v262 = vunpack.c.l.s4 839922192
        %v263 = vunpack.c.0.s8 %v262
        %v264 = vlaneseq
        %v265 = vshrl.u32 %v264, 7
        %v266 = vsub.s32 %v263, %v265
        %v267 = vrot.slane %v260, %v266
        %v269 = vmul.f32 %v256, %v267
        %271 = vset.pattern.permute.xlu0 0
        %272 = vperm.xlu0 %271, %v255
        %v273 = vpop.permute.xlu0 %272
        %v275 = vunpack.c.l.s4 839922192
        %v276 = vunpack.c.0.s8 %v275
        %v277 = vlaneseq
        %v278 = vshrl.u32 %v277, 7
        %v279 = vsub.s32 %v276, %v278
        %v280 = vrot.slane %v273, %v279
        %v282 = vadd.f32 %v269, %v280
        %283 = vst [vmem:[%s243] sm:$0xff] %v282
        %s284 = sand.u32 %s133, 1
        %s285 = scalar_lea.sflag [#allocation4], %s284
        %s286 = sand.u32 %s133, 1
        %s287 = smul.addr %s286, 8
        %s288 = scalar_lea.vmem [#allocation5], %s287
        // Predicated region
        $region37: #{tpu_custom_call.1} parent=31 // pred_check
          %p289 = pneg %p143
        $region38: #{tpu_custom_call.1} parent=31 // pred_check_branch
          %291 = sbr.rel (%p289) target = $region40
        $region39: #{tpu_custom_call.1} parent=31 // pred_region
          %s292 = smul.u32 2, %s27
          %s294 = ssub.s32 128, 128
          %295 = vsyncadd %s285, %s294
          %s296 = smul.addr %s26, 2
          %s297 = sadd.s32 %s292, %s296
          %s298 = smul.addr %s25, 2
          %s299 = sadd.s32 %s297, %s298
          %s300 = smul.addr %s299, 64
          %s301 = scalar_lea.hbm %s3, %s300
          %s303 = sshll.u32 %s288, 4
          %s304 = int_to_ptr.vmem [resolvable:$true] %s303
          %306 = dma.vmem_to_hbm [thread:$0]  %s304, 128, %s301, %s285
        $region40: #{tpu_custom_call.1} parent=31 // pred_fallthru
          _
      $region32: #{tpu_custom_call.1} parent=5 // pred_fallthru
        _
      %p307 = scmp.le.s32.totalorder 2, %s15
      // Predicated region
      $region41: #{tpu_custom_call.1} parent=5 // pred_check
        %p308 = pneg %p307
      $region42: #{tpu_custom_call.1} parent=5 // pred_check_branch
        %310 = sbr.rel (%p308) target = $region44
      $region43: #{tpu_custom_call.1} parent=5 // pred_region
        %s311 = ssub.s32 %s15, 2
        // Predicated region
        $region45: #{tpu_custom_call.1} parent=43 // pred_check
          %p312 = pneg %p149
        $region46: #{tpu_custom_call.1} parent=43 // pred_check_branch
          %314 = sbr.rel (%p312) target = $region48
        $region47: #{tpu_custom_call.1} parent=43 // pred_region
          %s315 = sand.u32 %s134, 1
          %s316 = scalar_lea.sflag [#allocation4], %s315
          %s317 = sand.u32 %s134, 1
          %s318 = smul.addr %s317, 8
          %s319 = scalar_lea.vmem [#allocation5], %s318
          %320 = dma.done %s316, 128
        $region48: #{tpu_custom_call.1} parent=43 // pred_fallthru
          _
      $region44: #{tpu_custom_call.1} parent=5 // pred_fallthru
        _
    $region6: #{tpu_custom_call.1} parent=1 // loop_footer
      %s19 = sadd.s32 1, %s15
    $region7: #{tpu_custom_call.1} parent=1 // loop_footer_branch
      %14 = sbr.rel target = $region3
    $region8: #{tpu_custom_call.1} parent=1 // loop_exit
      _
    %321 = vsyncpa [#allocation3], 1
    %s322 = scalar_lea.sflag [#allocation3], 1
    %323 = vsyncpa %s322, 1
    %324 = vsyncpa [#allocation4], 1
    %s325 = scalar_lea.sflag [#allocation4], 1
    %326 = vsyncpa %s325, 1

</llo_original>
